<compile_context>
chip_gen: v6e
topology: v6e:2x2x1
jax: 0.10.0
libtpu: 0.0.40
codegen_flags: <defaults>
</compile_context>

<pallas_src>
import functools

import jax
import jax.numpy as jnp
from jax.experimental import pallas as pl
from jax.experimental.pallas import tpu as pltpu


# ----------------------------- Pallas kernel -------------------------------

def fused_net_kernel(x_ref, lhat_ref, pool_ref, wlin_ref, wcheb_ref, aux_ref,
                     bfc2_ref, out_ref, *, dim):
    """Fused forward for both encoders + fc2 head.

    x_ref:    [2, NP, FP]  bf16  padded node features; column F holds 1.0 (bias fold)
    lhat_ref: [2, NP, NP]  bf16  padded scaled Laplacian (= -D^-1/2 A D^-1/2)
    pool_ref: [2, BP, NP]  f32   padded segment-sum (global_add_pool) matrix
    wlin_ref: [2, FP, DP]  bf16  lin0 weight^T; row F holds the lin0 bias
    wcheb_ref:[2, DP, DP]  bf16  W0^T at rows [0:dim], W1^T at rows [dim:2*dim]
    aux_ref:  [2, 2, DP]   f32   aux[e,0]=cheb bias, aux[e,1]=fc2 weight row, enc e
    bfc2_ref: [1, 1] SMEM  f32   fc2 bias
    out_ref:  [BP, 128]    f32   pred broadcast along lanes (slice [:B, 0] outside)
    """
    acc = None
    for e in range(2):                               # unrolled: 2 encoders, 1 call
        # lin0 (+ folded bias via ones-column) + ReLU.  bf16 MXU, f32 accumulate.
        h = jnp.dot(x_ref[e], wlin_ref[e], preferred_element_type=jnp.float32)
        h = jnp.maximum(h, 0.0)                                       # [NP, DP]

        # Scaled-Laplacian propagation: T1 = Lhat @ h.
        tx1 = jnp.dot(lhat_ref[e], h.astype(jnp.bfloat16),
                      preferred_element_type=jnp.float32)             # [NP, DP]

        # Compact ChebConv K=2: shift T1 into lanes [dim:2*dim] (XLU roll, off the
        # MXU slot), add to h (VPU), and do ONE K=DP matmul against the packed
        # [W0 ; W1] weight.  Valid while 2*dim <= DP (asserted at pack time).
        m = (h + pltpu.roll(tx1, shift=dim, axis=1)).astype(jnp.bfloat16)
        aux_e = aux_ref[e]                                            # [2, DP] f32
        c = jnp.dot(m, wcheb_ref[e], preferred_element_type=jnp.float32)
        # NOTE: padded node rows become relu(cheb_bias); they are masked out by the
        # zero columns of the pooling matrix (add-pool only — see review note).
        c = jnp.maximum(c + aux_e[0:1, :], 0.0)                       # [NP, DP]

        # global_add_pool as a matmul with the segment matrix (kept in f32).
        pooled = jnp.dot(pool_ref[e], c, preferred_element_type=jnp.float32)

        # fc2 over concat(out1, out2) == per-encoder dot with its fc2-weight slice:
        # VPU broadcast-multiply now, lane reduction after both encoders.
        contrib = pooled * aux_e[1:2, :]                              # [BP, DP]
        acc = contrib if acc is None else acc + contrib

    pred = jnp.sum(acc, axis=-1, keepdims=True) + bfc2_ref[0, 0]      # [BP, 1]
    out_ref[...] = jnp.broadcast_to(pred, out_ref.shape)              # lane-dense


# ------------------------------- Wrappers ----------------------------------

def _round_up(v, m):
    return (v + m - 1) // m * m


@functools.partial(jax.jit,
                   static_argnames=("n_graphs", "n_nodes", "num_features", "dim"))
def net_forward(x, lhat, pool, wlin, wcheb, aux, bfc2, *,
                n_graphs, n_nodes, num_features, dim):
    """Single fused pallas_call over pre-padded, pre-cast operands."""
    BP = pool.shape[1]

    # Cost estimate from TRUE sizes (advisory hint for XLA scheduling).
    per_enc = (2 * n_nodes * (num_features + 1) * dim      # lin0
               + 2 * n_nodes * n_nodes * dim               # Lhat @ h
               + 2 * n_nodes * (2 * dim) * dim             # ChebConv matmul
               + 2 * n_graphs * n_nodes * dim)             # add-pool
    flops = 2 * per_enc + 2 * n_graphs * (2 * dim)         # + fc2 head
    bytes_accessed = sum(int(a.size) * a.dtype.itemsize
                         for a in (x, lhat, pool, wlin, wcheb, aux, bfc2))
    bytes_accessed += BP * 128 * 4                          # output

    vmem = pl.BlockSpec(memory_space=pltpu.MemorySpace.VMEM)
    smem = pl.BlockSpec(memory_space=pltpu.MemorySpace.SMEM)
    out = pl.pallas_call(
        functools.partial(fused_net_kernel, dim=dim),
        out_shape=jax.ShapeDtypeStruct((BP, 128), jnp.float32),
        in_specs=[vmem, vmem, vmem, vmem, vmem, vmem, smem],
        out_specs=vmem,
        compiler_params=pltpu.CompilerParams(vmem_limit_bytes=32 * 1024 * 1024),
        cost_estimate=pl.CostEstimate(flops=flops, transcendentals=0,
                                      bytes_accessed=bytes_accessed),
    )(x, lhat, pool, wlin, wcheb, aux, bfc2)
    return out[:n_graphs, 0]                                # .view(-1)


def prepare_graph_inputs(x1, lhat1, pool1, x2, lhat2, pool2, num_features):
    """Pad + stack graph data ONCE at setup (outside the jitted forward).

    Zero padding is exact: padded nodes are isolated in Lhat and masked out of the
    pooling matrix; padded feature/dim columns multiply zero weights.
    """
    N, F = x1.shape
    B = pool1.shape[0]
    NP = _round_up(N, 16)                  # bf16 sublane multiple (NOT 128)
    BP = _round_up(B, 8)                   # f32 sublane multiple
    FP = _round_up(num_features + 1, 128)  # +1 column for the folded lin0 bias

    x = jnp.zeros((2, NP, FP), jnp.float32)
    x = x.at[0, :N, :F].set(x1).at[1, :N, :F].set(x2)
    x = x.at[:, :N, F].set(1.0)            # ones-column -> lin0 bias (valid rows only)
    lhat = jnp.zeros((2, NP, NP), jnp.float32)
    lhat = lhat.at[0, :N, :N].set(lhat1).at[1, :N, :N].set(lhat2)
    pool = jnp.zeros((2, BP, NP), jnp.float32)
    pool = pool.at[0, :B, :N].set(pool1).at[1, :B, :N].set(pool2)
    # MXU operands in bf16 (f32 accumulation inside the kernel); pool stays f32.
    return x.astype(jnp.bfloat16), lhat.astype(jnp.bfloat16), pool


# --------------------------- Param / graph setup ----------------------------

def xavier_uniform_t(key, fan_in, fan_out):
    """PyTorch xavier_uniform_ on weight [out, in]; returned pre-transposed [in, out]."""
    bound = (6.0 / (fan_in + fan_out)) ** 0.5
    w = jax.random.uniform(key, (fan_out, fan_in), minval=-bound, maxval=bound,
                           dtype=jnp.float32)
    return w.T


def make_raw_params(key, num_features, dim):
    ks = jax.random.split(key, 7)
    return {
        # PyEncoder (encoder1)
        "p_lin0_w": xavier_uniform_t(ks[0], num_features, dim),
        "p_lin0_b": jnp.zeros((dim,), jnp.float32),
        "p_cheb_w0": xavier_uniform_t(ks[1], dim, dim),
        "p_cheb_w1": xavier_uniform_t(ks[2], dim, dim),
        "p_cheb_b": jnp.zeros((dim,), jnp.float32),
        # JavaEncoder (encoder2)
        "j_lin0_w": xavier_uniform_t(ks[3], num_features, dim),
        "j_lin0_b": jnp.zeros((dim,), jnp.float32),
        "j_cheb_w0": xavier_uniform_t(ks[4], dim, dim),
        "j_cheb_w1": xavier_uniform_t(ks[5], dim, dim),
        "j_cheb_b": jnp.zeros((dim,), jnp.float32),
        # fc2: Linear(2*dim, 1)
        "fc2_w": xavier_uniform_t(ks[6], 2 * dim, 1),   # [2*dim, 1]
        "fc2_b": jnp.zeros((1,), jnp.float32),
    }


def pack_params(raw, num_features, dim):
    """Pad/stack the per-encoder weights once at setup into the kernel layout."""
    FP = _round_up(num_features + 1, 128)
    DP = _round_up(dim, 128)
    # Compact K-packing of the ChebConv: W0 at rows [0:dim], W1 at rows [dim:2*dim].
    assert 2 * dim <= DP, "compact ChebConv packing needs 2*dim <= round_up(dim,128)"

    wlin = jnp.zeros((2, FP, DP), jnp.float32)
    wcheb = jnp.zeros((2, DP, DP), jnp.float32)
    aux = jnp.zeros((2, 2, DP), jnp.float32)
    for e, p in enumerate(("p", "j")):
        wlin = wlin.at[e, :num_features, :dim].set(raw[f"{p}_lin0_w"])
        wlin = wlin.at[e, num_features, :dim].set(raw[f"{p}_lin0_b"])
        wcheb = wcheb.at[e, :dim, :dim].set(raw[f"{p}_cheb_w0"])
        wcheb = wcheb.at[e, dim:2 * dim, :dim].set(raw[f"{p}_cheb_w1"])
        aux = aux.at[e, 0, :dim].set(raw[f"{p}_cheb_b"])
    # concat(out1, out2) order -> fc2 rows [:dim] pair with encoder1, [dim:] with 2.
    aux = aux.at[0, 1, :dim].set(raw["fc2_w"][:dim, 0])
    aux = aux.at[1, 1, :dim].set(raw["fc2_w"][dim:, 0])
    return {"wlin": wlin.astype(jnp.bfloat16),
            "wcheb": wcheb.astype(jnp.bfloat16),
            "aux": aux,
            "bfc2": raw["fc2_b"].reshape(1, 1)}


def build_lhat(adj):
    """Scaled Chebyshev Laplacian for normalization='sym', lambda_max=2.0."""
    # TODO(synk): per-graph lambda_max (if ever passed in PyTorch) is not modeled.
    deg = adj.sum(axis=1)
    dinv_sqrt = jnp.where(deg > 0, 1.0 / jnp.sqrt(jnp.maximum(deg, 1e-12)), 0.0)
    s = dinv_sqrt[:, None] * adj * dinv_sqrt[None, :]
    return -s                       # Lhat = (2/lmax) * (I - S) - I = -S


def random_graph(key, n_nodes, p=0.25):
    """Symmetric 0/1 adjacency, no self loops (dense stand-in for edge_index)."""
    upper = jax.random.bernoulli(key, p, (n_nodes, n_nodes)).astype(jnp.float32)
    upper = jnp.triu(upper, k=1)
    return upper + upper.T


# ---------------------------- Pure-JAX reference -----------------------------

def reference_forward(x1, lhat1, pool1, x2, lhat2, pool2, raw):
    hp = jax.lax.Precision.HIGHEST

    def enc(x, lhat, pool, w, b, w0, w1, bc):
        h = jax.nn.relu(jnp.dot(x, w, precision=hp) + b)
        c = jax.nn.relu(jnp.dot(h, w0, precision=hp)
                        + jnp.dot(jnp.dot(lhat, h, precision=hp), w1, precision=hp)
                        + bc)
        return jnp.dot(pool, c, precision=hp)

    o1 = enc(x1, lhat1, pool1, raw["p_lin0_w"], raw["p_lin0_b"],
             raw["p_cheb_w0"], raw["p_cheb_w1"], raw["p_cheb_b"])
    o2 = enc(x2, lhat2, pool2, raw["j_lin0_w"], raw["j_lin0_b"],
             raw["j_cheb_w0"], raw["j_cheb_w1"], raw["j_cheb_b"])
    cat = jnp.concatenate([o1, o2], axis=1)
    return (jnp.dot(cat, raw["fc2_w"], precision=hp) + raw["fc2_b"]).reshape(-1)


# ---------------------------------- Main ------------------------------------

if __name__ == "__main__":
    NUM_FEATURES = 16
    DIM = 32
    N_NODES = 32          # nodes per modality (x1 and x2)
    N_GRAPHS = 2          # batch of graphs

    root = jax.random.PRNGKey(0)
    k_par, k_x1, k_x2, k_a1, k_a2 = jax.random.split(root, 5)

    raw = make_raw_params(k_par, NUM_FEATURES, DIM)
    packed = pack_params(raw, NUM_FEATURES, DIM)

    # Node features (data.x1, data.x2), float32
    x1 = jax.random.normal(k_x1, (N_NODES, NUM_FEATURES), dtype=jnp.float32)
    x2 = jax.random.normal(k_x2, (N_NODES, NUM_FEATURES), dtype=jnp.float32)

    # Graph structure (data.edge_index1 / edge_index2) as dense adjacency
    lhat1 = build_lhat(random_graph(k_a1, N_NODES))
    lhat2 = build_lhat(random_graph(k_a2, N_NODES))

    # Batch assignment (data.x1_batch / x2_batch): first half -> graph 0, rest -> 1
    batch1 = jnp.concatenate([jnp.zeros(N_NODES // 2, jnp.int32),
                              jnp.ones(N_NODES - N_NODES // 2, jnp.int32)])
    pool1 = jax.nn.one_hot(batch1, N_GRAPHS, dtype=jnp.float32).T   # [B, N]
    pool2 = pool1

    # Pad / stack / cast the structural graph operands ONCE (outside the jit).
    xs, lhats, pools = prepare_graph_inputs(x1, lhat1, pool1, x2, lhat2, pool2,
                                            NUM_FEATURES)

    pred = net_forward(xs, lhats, pools, packed["wlin"], packed["wcheb"],
                       packed["aux"], packed["bfc2"],
                       n_graphs=N_GRAPHS, n_nodes=N_NODES,
                       num_features=NUM_FEATURES, dim=DIM)
    pred = jax.block_until_ready(pred)

    ref = reference_forward(x1, lhat1, pool1, x2, lhat2, pool2, raw)
    ref = jax.block_until_ready(ref)

    assert pred.shape == (N_GRAPHS,)
    assert bool(jnp.all(jnp.isfinite(pred)))
    # Tolerance reflects bf16 MXU operands (f32 accumulation) vs an f32-HIGHEST
    # reference.
    assert jnp.allclose(pred, ref, rtol=2e-2, atol=1e-1), (pred, ref)
    print("KERNEL_OK")
</pallas_src>

<mosaic_0001>
module attributes {stable_mosaic.version = 11 : i64} {
  func.func @fused_net_kernel(%arg0: memref<2x32x128xbf16, #tpu.memory_space<vmem>>, %arg1: memref<2x32x32xbf16, #tpu.memory_space<vmem>>, %arg2: memref<2x8x32xf32, #tpu.memory_space<vmem>>, %arg3: memref<2x128x128xbf16, #tpu.memory_space<vmem>>, %arg4: memref<2x128x128xbf16, #tpu.memory_space<vmem>>, %arg5: memref<2x2x128xf32, #tpu.memory_space<vmem>>, %arg6: memref<1x1xf32, #tpu.memory_space<smem>>, %arg7: memref<8x128xf32, #tpu.memory_space<vmem>>) attributes {dimension_semantics = [], scalar_prefetch = 0 : i64, scratch_operands = 0 : i64, tpu.core_type = #tpu.core_type<tc>} {
    %c0 = arith.constant 0 : index
    %c0_0 = arith.constant 0 : index
    %c0_1 = arith.constant 0 : index
    %0 = vector.load %arg0[%c0, %c0_0, %c0_1] : memref<2x32x128xbf16, #tpu.memory_space<vmem>>, vector<1x32x128xbf16>
    %1 = vector.shape_cast %0 : vector<1x32x128xbf16> to vector<32x128xbf16>
    %c0_2 = arith.constant 0 : index
    %c0_3 = arith.constant 0 : index
    %c0_4 = arith.constant 0 : index
    %2 = vector.load %arg3[%c0_2, %c0_3, %c0_4] : memref<2x128x128xbf16, #tpu.memory_space<vmem>>, vector<1x128x128xbf16>
    %3 = vector.shape_cast %2 : vector<1x128x128xbf16> to vector<128x128xbf16>
    %cst = arith.constant dense<0.000000e+00> : vector<32x128xf32>
    %4 = tpu.matmul %1, %3, %cst {dimension_numbers = #tpu.dot_dimension_numbers<[1], [0], [0], [1], [0, 0, 1, 1], [], []>} : vector<32x128xbf16>, vector<128x128xbf16>, vector<32x128xf32> -> vector<32x128xf32>
    %cst_5 = arith.constant 0.000000e+00 : f32
    %5 = vector.broadcast %cst_5 : f32 to vector<32x128xf32>
    %6 = arith.maximumf %4, %5 : vector<32x128xf32>
    %c0_6 = arith.constant 0 : index
    %c0_7 = arith.constant 0 : index
    %c0_8 = arith.constant 0 : index
    %7 = vector.load %arg1[%c0_6, %c0_7, %c0_8] : memref<2x32x32xbf16, #tpu.memory_space<vmem>>, vector<1x32x32xbf16>
    %8 = vector.shape_cast %7 : vector<1x32x32xbf16> to vector<32x32xbf16>
    %9 = arith.truncf %6 : vector<32x128xf32> to vector<32x128xbf16>
    %cst_9 = arith.constant dense<0.000000e+00> : vector<32x128xf32>
    %10 = tpu.matmul %8, %9, %cst_9 {dimension_numbers = #tpu.dot_dimension_numbers<[1], [0], [0], [1], [0, 0, 1, 1], [], []>} : vector<32x32xbf16>, vector<32x128xbf16>, vector<32x128xf32> -> vector<32x128xf32>
    %c32_i32 = arith.constant 32 : i32
    %11 = tpu.dynamic_rotate %10 by %c32_i32 dim 1 : vector<32x128xf32>, i32 -> vector<32x128xf32>
    %12 = arith.addf %6, %11 : vector<32x128xf32>
    %13 = arith.truncf %12 : vector<32x128xf32> to vector<32x128xbf16>
    %c0_10 = arith.constant 0 : index
    %c0_11 = arith.constant 0 : index
    %c0_12 = arith.constant 0 : index
    %14 = vector.load %arg5[%c0_10, %c0_11, %c0_12] : memref<2x2x128xf32, #tpu.memory_space<vmem>>, vector<1x2x128xf32>
    %15 = vector.shape_cast %14 : vector<1x2x128xf32> to vector<2x128xf32>
    %c0_13 = arith.constant 0 : index
    %c0_14 = arith.constant 0 : index
    %c0_15 = arith.constant 0 : index
    %16 = vector.load %arg4[%c0_13, %c0_14, %c0_15] : memref<2x128x128xbf16, #tpu.memory_space<vmem>>, vector<1x128x128xbf16>
    %17 = vector.shape_cast %16 : vector<1x128x128xbf16> to vector<128x128xbf16>
    %cst_16 = arith.constant dense<0.000000e+00> : vector<32x128xf32>
    %18 = tpu.matmul %13, %17, %cst_16 {dimension_numbers = #tpu.dot_dimension_numbers<[1], [0], [0], [1], [0, 0, 1, 1], [], []>} : vector<32x128xbf16>, vector<128x128xbf16>, vector<32x128xf32> -> vector<32x128xf32>
    %19 = vector.extract_strided_slice %15 {offsets = [0, 0], sizes = [1, 128], strides = [1, 1]} : vector<2x128xf32> to vector<1x128xf32>
    %20 = vector.broadcast %19 : vector<1x128xf32> to vector<32x128xf32>
    %21 = arith.addf %18, %20 : vector<32x128xf32>
    %cst_17 = arith.constant 0.000000e+00 : f32
    %22 = vector.broadcast %cst_17 : f32 to vector<32x128xf32>
    %23 = arith.maximumf %21, %22 : vector<32x128xf32>
    %c0_18 = arith.constant 0 : index
    %c0_19 = arith.constant 0 : index
    %c0_20 = arith.constant 0 : index
    %24 = vector.load %arg2[%c0_18, %c0_19, %c0_20] : memref<2x8x32xf32, #tpu.memory_space<vmem>>, vector<1x8x32xf32>
    %25 = vector.shape_cast %24 : vector<1x8x32xf32> to vector<8x32xf32>
    %cst_21 = arith.constant dense<0.000000e+00> : vector<8x128xf32>
    %26 = tpu.matmul %25, %23, %cst_21 {dimension_numbers = #tpu.dot_dimension_numbers<[1], [0], [0], [1], [0, 0, 1, 1], [], []>} : vector<8x32xf32>, vector<32x128xf32>, vector<8x128xf32> -> vector<8x128xf32>
    %27 = vector.extract_strided_slice %15 {offsets = [1, 0], sizes = [1, 128], strides = [1, 1]} : vector<2x128xf32> to vector<1x128xf32>
    %28 = vector.broadcast %27 : vector<1x128xf32> to vector<8x128xf32>
    %29 = arith.mulf %26, %28 : vector<8x128xf32>
    %c1 = arith.constant 1 : index
    %c0_22 = arith.constant 0 : index
    %c0_23 = arith.constant 0 : index
    %30 = vector.load %arg0[%c1, %c0_22, %c0_23] : memref<2x32x128xbf16, #tpu.memory_space<vmem>>, vector<1x32x128xbf16>
    %31 = vector.shape_cast %30 : vector<1x32x128xbf16> to vector<32x128xbf16>
    %c1_24 = arith.constant 1 : index
    %c0_25 = arith.constant 0 : index
    %c0_26 = arith.constant 0 : index
    %32 = vector.load %arg3[%c1_24, %c0_25, %c0_26] : memref<2x128x128xbf16, #tpu.memory_space<vmem>>, vector<1x128x128xbf16>
    %33 = vector.shape_cast %32 : vector<1x128x128xbf16> to vector<128x128xbf16>
    %cst_27 = arith.constant dense<0.000000e+00> : vector<32x128xf32>
    %34 = tpu.matmul %31, %33, %cst_27 {dimension_numbers = #tpu.dot_dimension_numbers<[1], [0], [0], [1], [0, 0, 1, 1], [], []>} : vector<32x128xbf16>, vector<128x128xbf16>, vector<32x128xf32> -> vector<32x128xf32>
    %cst_28 = arith.constant 0.000000e+00 : f32
    %35 = vector.broadcast %cst_28 : f32 to vector<32x128xf32>
    %36 = arith.maximumf %34, %35 : vector<32x128xf32>
    %c1_29 = arith.constant 1 : index
    %c0_30 = arith.constant 0 : index
    %c0_31 = arith.constant 0 : index
    %37 = vector.load %arg1[%c1_29, %c0_30, %c0_31] : memref<2x32x32xbf16, #tpu.memory_space<vmem>>, vector<1x32x32xbf16>
    %38 = vector.shape_cast %37 : vector<1x32x32xbf16> to vector<32x32xbf16>
    %39 = arith.truncf %36 : vector<32x128xf32> to vector<32x128xbf16>
    %cst_32 = arith.constant dense<0.000000e+00> : vector<32x128xf32>
    %40 = tpu.matmul %38, %39, %cst_32 {dimension_numbers = #tpu.dot_dimension_numbers<[1], [0], [0], [1], [0, 0, 1, 1], [], []>} : vector<32x32xbf16>, vector<32x128xbf16>, vector<32x128xf32> -> vector<32x128xf32>
    %c32_i32_33 = arith.constant 32 : i32
    %41 = tpu.dynamic_rotate %40 by %c32_i32_33 dim 1 : vector<32x128xf32>, i32 -> vector<32x128xf32>
    %42 = arith.addf %36, %41 : vector<32x128xf32>
    %43 = arith.truncf %42 : vector<32x128xf32> to vector<32x128xbf16>
    %c1_34 = arith.constant 1 : index
    %c0_35 = arith.constant 0 : index
    %c0_36 = arith.constant 0 : index
    %44 = vector.load %arg5[%c1_34, %c0_35, %c0_36] : memref<2x2x128xf32, #tpu.memory_space<vmem>>, vector<1x2x128xf32>
    %45 = vector.shape_cast %44 : vector<1x2x128xf32> to vector<2x128xf32>
    %c1_37 = arith.constant 1 : index
    %c0_38 = arith.constant 0 : index
    %c0_39 = arith.constant 0 : index
    %46 = vector.load %arg4[%c1_37, %c0_38, %c0_39] : memref<2x128x128xbf16, #tpu.memory_space<vmem>>, vector<1x128x128xbf16>
    %47 = vector.shape_cast %46 : vector<1x128x128xbf16> to vector<128x128xbf16>
    %cst_40 = arith.constant dense<0.000000e+00> : vector<32x128xf32>
    %48 = tpu.matmul %43, %47, %cst_40 {dimension_numbers = #tpu.dot_dimension_numbers<[1], [0], [0], [1], [0, 0, 1, 1], [], []>} : vector<32x128xbf16>, vector<128x128xbf16>, vector<32x128xf32> -> vector<32x128xf32>
    %49 = vector.extract_strided_slice %45 {offsets = [0, 0], sizes = [1, 128], strides = [1, 1]} : vector<2x128xf32> to vector<1x128xf32>
    %50 = vector.broadcast %49 : vector<1x128xf32> to vector<32x128xf32>
    %51 = arith.addf %48, %50 : vector<32x128xf32>
    %cst_41 = arith.constant 0.000000e+00 : f32
    %52 = vector.broadcast %cst_41 : f32 to vector<32x128xf32>
    %53 = arith.maximumf %51, %52 : vector<32x128xf32>
    %c1_42 = arith.constant 1 : index
    %c0_43 = arith.constant 0 : index
    %c0_44 = arith.constant 0 : index
    %54 = vector.load %arg2[%c1_42, %c0_43, %c0_44] : memref<2x8x32xf32, #tpu.memory_space<vmem>>, vector<1x8x32xf32>
    %55 = vector.shape_cast %54 : vector<1x8x32xf32> to vector<8x32xf32>
    %cst_45 = arith.constant dense<0.000000e+00> : vector<8x128xf32>
    %56 = tpu.matmul %55, %53, %cst_45 {dimension_numbers = #tpu.dot_dimension_numbers<[1], [0], [0], [1], [0, 0, 1, 1], [], []>} : vector<8x32xf32>, vector<32x128xf32>, vector<8x128xf32> -> vector<8x128xf32>
    %57 = vector.extract_strided_slice %45 {offsets = [1, 0], sizes = [1, 128], strides = [1, 1]} : vector<2x128xf32> to vector<1x128xf32>
    %58 = vector.broadcast %57 : vector<1x128xf32> to vector<8x128xf32>
    %59 = arith.mulf %56, %58 : vector<8x128xf32>
    %60 = arith.addf %29, %59 : vector<8x128xf32>
    %cst_46 = arith.constant dense<0.000000e+00> : vector<8xf32>
    %61 = vector.multi_reduction <add>, %60, %cst_46 [1] : vector<8x128xf32> to vector<8xf32>
    %62 = vector.shape_cast %61 : vector<8xf32> to vector<8x1xf32>
    %c0_47 = arith.constant 0 : index
    %c0_48 = arith.constant 0 : index
    %63 = memref.load %arg6[%c0_47, %c0_48] : memref<1x1xf32, #tpu.memory_space<smem>>
    %64 = vector.broadcast %63 : f32 to vector<8x1xf32>
    %65 = arith.addf %62, %64 : vector<8x1xf32>
    %66 = vector.shape_cast %65 : vector<8x1xf32> to vector<8x1xf32>
    %67 = vector.broadcast %66 : vector<8x1xf32> to vector<8x128xf32>
    %c0_49 = arith.constant 0 : index
    %c0_50 = arith.constant 0 : index
    %68 = vector.load %arg7[%c0_49, %c0_50] : memref<8x128xf32, #tpu.memory_space<vmem>>, vector<8x128xf32>
    tpu.vector_store %arg7[%c0_49, %c0_50], %67 {strides = array<i32>} : memref<8x128xf32, #tpu.memory_space<vmem>>, vector<8x128xf32>,
    return
  }
}

</mosaic_0001>

<llo_original>
// kernel: net_forward.1
$region0: #{net_forward.1}
  #allocation0 [shape = 'u32[]', space=smem, size = 0x4, offset = 0x4, fixed_abs, tag = 'smem constant byte address 0x4 - core index']
  #allocation1 [shape = 'u32[144,128]{1,0:T(1,128)}', space=vmem, size = 0x12000, scoped, tag = 'internal scratch']
  #allocation2 [shape = 'f32[1,1]{1,0:T(1,128)S(6)}', space=smem, size = 0x200, scoped, tag = 'scoped memory for net_forward.1']
  %s0 = inlined_call_operand.hbm [shape: bf16[2,32,128], index: 0, kind: input, shape index: {}]
  %s1 = inlined_call_operand.hbm [shape: bf16[2,32,32], index: 1, kind: input, shape index: {}]
  %s2 = inlined_call_operand.hbm [shape: f32[2,8,32], index: 2, kind: input, shape index: {}]
  %s3 = inlined_call_operand.hbm [shape: bf16[2,128,128], index: 3, kind: input, shape index: {}]
  %s4 = inlined_call_operand.hbm [shape: bf16[2,128,128], index: 4, kind: input, shape index: {}]
  %s5 = inlined_call_operand.vmem [shape: f32[2,2,128], index: 5, kind: input, shape index: {}]
  %s6 = inlined_call_operand.<no memory space> [shape: f32[1,1], index: 6, kind: input, shape index: {}]
  %s7 = inlined_call_operand.vmem [shape: f32[8,128], index: 7, kind: output, shape index: {}]
  %s8 = sld [smem:[#allocation0]]
  $region58: #{net_forward.1} parent=0
    _
  %s10 = ssub.s32 1, %s8
  %s11 = scalar_select 0, %s10, %s8
  %12 = sst [smem:[#allocation2]] %s6
  $region1: #{net_forward.1} parent=0
    #allocation3 [shape = 'u8[16384]{0}', space=vmem, size = 0x4000, scoped, tag = 'input window, operand 0, single buffered']
    #allocation4 [shape = 's32[1]{0}', space=sflag, size = 0x4, scoped, tag = 'scoped memory for net_forward.1']
    #allocation5 [shape = 'u8[16384]{0}', space=vmem, size = 0x4000, scoped, tag = 'input window, operand 1, single buffered']
    #allocation6 [shape = 's32[1]{0}', space=sflag, size = 0x4, scoped, tag = 'scoped memory for net_forward.1']
    #allocation7 [shape = 'u8[8192]{0}', space=vmem, size = 0x2000, scoped, tag = 'input window, operand 2, single buffered']
    #allocation8 [shape = 'u8[65536]{0}', space=vmem, size = 0x10000, scoped, tag = 'input window, operand 3, single buffered']
    #allocation9 [shape = 's32[1]{0}', space=sflag, size = 0x4, scoped, tag = 'scoped memory for net_forward.1']
    #allocation10 [shape = 'u8[65536]{0}', space=vmem, size = 0x10000, scoped, tag = 'input window, operand 4, single buffered']
    %13 = vsyncpa [#allocation4], 0
    %14 = vsyncpa [#allocation6], 0
    %15 = vsyncpa [#allocation9], 0
    // Predicated region
    $region2: #{net_forward.1} parent=1 // pred_check
      _
    $region3: #{net_forward.1} parent=1 // pred_check_branch
      %17 = sbr.rel (0) target = $region5
    $region4: #{net_forward.1} parent=1 // pred_region
      %s19 = ssub.s32 512, 512
      %20 = vsyncadd [#allocation4], %s19
      %s21 = sshll.u32 [#allocation3], 4
      %s22 = int_to_ptr.vmem [resolvable:$true] %s21
      %27 = dma.hbm_to_vmem [thread:$0]  %s0, 512, %s22, [#allocation4], 64, 64, 4
    $region5: #{net_forward.1} parent=1 // pred_fallthru
      _
    // Predicated region
    $region6: #{net_forward.1} parent=1 // pred_check
      _
    $region7: #{net_forward.1} parent=1 // pred_check_branch
      %29 = sbr.rel (0) target = $region9
    $region8: #{net_forward.1} parent=1 // pred_region
      %s31 = ssub.s32 512, 512
      %32 = vsyncadd [#allocation6], %s31
      %s33 = sshll.u32 [#allocation5], 4
      %s34 = int_to_ptr.vmem [resolvable:$true] %s33
      %39 = dma.hbm_to_vmem [thread:$0]  %s1, 512, %s34, [#allocation6], 64, 64, 4
    $region9: #{net_forward.1} parent=1 // pred_fallthru
      _
    // Predicated region
    $region10: #{net_forward.1} parent=1 // pred_check
      _
    $region11: #{net_forward.1} parent=1 // pred_check_branch
      %41 = sbr.rel (0) target = $region13
    $region12: #{net_forward.1} parent=1 // pred_region
      %s43 = ssub.s32 256, 256
      %44 = vsyncadd [#allocation6], %s43
      %s45 = sshll.u32 [#allocation7], 4
      %s46 = int_to_ptr.vmem [resolvable:$true] %s45
      %51 = dma.hbm_to_vmem [thread:$0]  %s2, 256, %s46, [#allocation6], 128, 128, 8
    $region13: #{net_forward.1} parent=1 // pred_fallthru
      _
    // Predicated region
    $region14: #{net_forward.1} parent=1 // pred_check
      _
    $region15: #{net_forward.1} parent=1 // pred_check_branch
      %53 = sbr.rel (0) target = $region17
    $region16: #{net_forward.1} parent=1 // pred_region
      %s55 = ssub.s32 2048, 2048
      %56 = vsyncadd [#allocation9], %s55
      %s57 = sshll.u32 [#allocation8], 4
      %s58 = int_to_ptr.vmem [resolvable:$true] %s57
      %63 = dma.hbm_to_vmem [thread:$0]  %s3, 2048, %s58, [#allocation9], 64, 64, 4
    $region17: #{net_forward.1} parent=1 // pred_fallthru
      _
    // Predicated region
    $region18: #{net_forward.1} parent=1 // pred_check
      _
    $region19: #{net_forward.1} parent=1 // pred_check_branch
      %65 = sbr.rel (0) target = $region21
    $region20: #{net_forward.1} parent=1 // pred_region
      %s67 = ssub.s32 2048, 2048
      %68 = vsyncadd [#allocation9], %s67
      %s69 = sshll.u32 [#allocation10], 4
      %s70 = int_to_ptr.vmem [resolvable:$true] %s69
      %75 = dma.hbm_to_vmem [thread:$0]  %s4, 2048, %s70, [#allocation9], 64, 64, 4
    $region21: #{net_forward.1} parent=1 // pred_fallthru
      _
    // Predicated region
    $region22: #{net_forward.1} parent=1 // pred_check
      _
    $region23: #{net_forward.1} parent=1 // pred_check_branch
      %77 = sbr.rel (0) target = $region25
    $region24: #{net_forward.1} parent=1 // pred_region
      _
    $region25: #{net_forward.1} parent=1 // pred_fallthru
      _
    // Predicated region
    $region26: #{net_forward.1} parent=1 // pred_check
      _
    $region27: #{net_forward.1} parent=1 // pred_check_branch
      %79 = sbr.rel (0) target = $region29
    $region28: #{net_forward.1} parent=1 // pred_region
      _
    $region29: #{net_forward.1} parent=1 // pred_fallthru
      _
    // Predicated region
    $region30: #{net_forward.1} parent=1 // pred_check
      _
    $region31: #{net_forward.1} parent=1 // pred_check_branch
      %81 = sbr.rel (0) target = $region33
    $region32: #{net_forward.1} parent=1 // pred_region
      %82 = dma.done [#allocation4], 512
    $region33: #{net_forward.1} parent=1 // pred_fallthru
      _
    // Predicated region
    $region34: #{net_forward.1} parent=1 // pred_check
      _
    $region35: #{net_forward.1} parent=1 // pred_check_branch
      %84 = sbr.rel (0) target = $region37
    $region36: #{net_forward.1} parent=1 // pred_region
      %85 = dma.done [#allocation6], 512
    $region37: #{net_forward.1} parent=1 // pred_fallthru
      _
    // Predicated region
    $region38: #{net_forward.1} parent=1 // pred_check
      _
    $region39: #{net_forward.1} parent=1 // pred_check_branch
      %87 = sbr.rel (0) target = $region41
    $region40: #{net_forward.1} parent=1 // pred_region
      %88 = dma.done [#allocation6], 256
    $region41: #{net_forward.1} parent=1 // pred_fallthru
      _
    // Predicated region
    $region42: #{net_forward.1} parent=1 // pred_check
      _
    $region43: #{net_forward.1} parent=1 // pred_check_branch
      %90 = sbr.rel (0) target = $region45
    $region44: #{net_forward.1} parent=1 // pred_region
      %91 = dma.done [#allocation9], 2048
    $region45: #{net_forward.1} parent=1 // pred_fallthru
      _
    // Predicated region
    $region46: #{net_forward.1} parent=1 // pred_check
      _
    $region47: #{net_forward.1} parent=1 // pred_check_branch
      %93 = sbr.rel (0) target = $region49
    $region48: #{net_forward.1} parent=1 // pred_region
      %94 = dma.done [#allocation9], 2048
    $region49: #{net_forward.1} parent=1 // pred_fallthru
      _
    %v96 = vld [vmem:[#allocation3] sm:$0xf]
    %v97 = vld [vmem:[#allocation3 + $0x4] sm:$0xf]
    %v98 = vld [vmem:[#allocation3 + $0x8] sm:$0xf]
    %v99 = vld [vmem:[#allocation3 + $0xc] sm:$0xf]
    %v100 = vld [vmem:[#allocation8] sm:$0xf]
    %v101 = vld [vmem:[#allocation8 + $0x4] sm:$0xf]
    %v102 = vld [vmem:[#allocation8 + $0x8] sm:$0xf]
    %v103 = vld [vmem:[#allocation8 + $0xc] sm:$0xf]
    %v104 = vld [vmem:[#allocation8 + $0x10] sm:$0xf]
    %v105 = vld [vmem:[#allocation8 + $0x14] sm:$0xf]
    %v106 = vld [vmem:[#allocation8 + $0x18] sm:$0xf]
    %v107 = vld [vmem:[#allocation8 + $0x1c] sm:$0xf]
    %v108 = vld [vmem:[#allocation8 + $0x20] sm:$0xf]
    %v109 = vld [vmem:[#allocation8 + $0x24] sm:$0xf]
    %v110 = vld [vmem:[#allocation8 + $0x28] sm:$0xf]
    %v111 = vld [vmem:[#allocation8 + $0x2c] sm:$0xf]
    %v112 = vld [vmem:[#allocation8 + $0x30] sm:$0xf]
    %v113 = vld [vmem:[#allocation8 + $0x34] sm:$0xf]
    %v114 = vld [vmem:[#allocation8 + $0x38] sm:$0xf]
    %v115 = vld [vmem:[#allocation8 + $0x3c] sm:$0xf]
    %v120 = vunpack.c.l.b16 %v96
    %v121 = vunpack.c.l.b16 %v97
    %v122 = vunpack.c.l.b16 %v98
    %v123 = vunpack.c.l.b16 %v99
    %v124 = vpack.c.b16 %v121, %v120
    %v125 = vpack.c.b16 %v123, %v122
    %v144 = vunpack.c.l.b16 %v100
    %v145 = vunpack.c.l.b16 %v101
    %v146 = vunpack.c.l.b16 %v102
    %v147 = vunpack.c.l.b16 %v103
    %v148 = vunpack.c.l.b16 %v104
    %v149 = vunpack.c.l.b16 %v105
    %v150 = vunpack.c.l.b16 %v106
    %v151 = vunpack.c.l.b16 %v107
    %v152 = vunpack.c.l.b16 %v108
    %v153 = vunpack.c.l.b16 %v109
    %v154 = vunpack.c.l.b16 %v110
    %v155 = vunpack.c.l.b16 %v111
    %v156 = vunpack.c.l.b16 %v112
    %v157 = vunpack.c.l.b16 %v113
    %v158 = vunpack.c.l.b16 %v114
    %v159 = vunpack.c.l.b16 %v115
    %v160 = vpack.c.b16 %v145, %v144
    %v161 = vpack.c.b16 %v147, %v146
    %v162 = vpack.c.b16 %v149, %v148
    %v163 = vpack.c.b16 %v151, %v150
    %v164 = vpack.c.b16 %v153, %v152
    %v165 = vpack.c.b16 %v155, %v154
    %v166 = vpack.c.b16 %v157, %v156
    %v167 = vpack.c.b16 %v159, %v158
    %176 = vmatprep.subr.bf16.mxu0 0
    %177 = vmatpush1.bf16.msra.mxu0 %v167
    %178 = vmatprep.subr.bf16.mxu0 0
    %179 = vmatpush1.bf16.msra.mxu0 %v166
    %180 = vmatprep.subr.bf16.mxu0 0
    %181 = vmatpush1.bf16.msra.mxu0 %v165
    %182 = vmatprep.subr.bf16.mxu0 0
    %183 = vmatpush1.bf16.msra.mxu0 %v164
    %184 = vmatprep.subr.bf16.mxu0 0
    %185 = vmatpush1.bf16.msra.mxu0 %v163
    %186 = vmatprep.subr.bf16.mxu0 0
    %187 = vmatpush1.bf16.msra.mxu0 %v162
    %188 = vmatprep.subr.bf16.mxu0 0
    %189 = vmatpush1.bf16.msra.mxu0 %v161
    %190 = vmatprep.subr.bf16.mxu0 0
    %191 = vmatpush1.bf16.msra.mxu0 %v160
    %192 = vmatprep.subr.bf16.mxu0 0
    %193 = vmatpush2.bf16.msra.mxu0 0
    %194 = vmatprep.subr.bf16.mxu0 0
    %195 = vmatpush2.bf16.msra.mxu0 0
    %196 = vmatprep.subr.bf16.mxu0 0
    %197 = vmatpush2.bf16.msra.mxu0 0
    %198 = vmatprep.subr.bf16.mxu0 0
    %199 = vmatpush2.bf16.msra.mxu0 0
    %200 = vmatprep.subr.bf16.mxu0 0
    %201 = vmatpush2.bf16.msra.mxu0 0
    %202 = vmatprep.subr.bf16.mxu0 0
    %203 = vmatpush2.bf16.msra.mxu0 0
    %204 = vmatprep.subr.bf16.mxu0 0
    %205 = vmatpush2.bf16.msra.mxu0 0
    %206 = vmatprep.subr.bf16.mxu0 0
    %207 = vmatpush2.bf16.msra.mxu0 0
    %208 = vmatprep.mubr.bf16.mxu0 0
    %209 = vmatmul.mubr.bf16.gmra.mxu0 %v124
    %v210 = vpop.f32.mrf.mxu0
    %v211 = vadd.f32 0.0, %v210
    %v212 = vpop.f32.mrf.mxu0
    %v213 = vpop.f32.mrf.mxu0
    %v214 = vadd.f32 0.0, %v213
    %v215 = vpop.f32.mrf.mxu0
    %216 = vmatprep.mubr.bf16.mxu0 0
    %217 = vmatmul.mubr.bf16.gmra.mxu0 %v125
    %v218 = vpop.f32.mrf.mxu0
    %v219 = vadd.f32 0.0, %v218
    %v220 = vpop.f32.mrf.mxu0
    %v221 = vpop.f32.mrf.mxu0
    %v222 = vadd.f32 0.0, %v221
    %v223 = vpop.f32.mrf.mxu0
    %224 = vdwg.mxu0
    %v225 = vmax.f32 %v211, 0.0
    %v226 = vmax.f32 %v214, 0.0
    %v227 = vmax.f32 %v219, 0.0
    %v228 = vmax.f32 %v222, 0.0
    %v229 = vld [vmem:[#allocation5] sm:$0xf]
    %v230 = vld [vmem:[#allocation5 + $0x4] sm:$0xf]
    %v231 = vld [vmem:[#allocation5 + $0x8] sm:$0xf]
    %v232 = vld [vmem:[#allocation5 + $0xc] sm:$0xf]
    %v233 = vpack.c.bf16 %v226, %v225
    %v234 = vpack.c.bf16 %v228, %v227
    %v239 = vunpack.c.l.b16 %v229
    %v240 = vunpack.c.l.b16 %v230
    %v241 = vunpack.c.l.b16 %v231
    %v242 = vunpack.c.l.b16 %v232
    %v243 = vpack.c.b16 %v240, %v239
    %v244 = vpack.c.b16 %v242, %v241
    %vm245 = vcmask 261120
    %v247 = vsel %vm245, %v243, 0
    %v250 = vsel %vm245, %v244, 0
    %252 = vmatprep.subr.bf16.mxu0 0
    %253 = vmatpush1.bf16.msra.mxu0 0
    %254 = vmatprep.subr.bf16.mxu0 0
    %255 = vmatpush1.bf16.msra.mxu0 0
    %256 = vmatprep.subr.bf16.mxu0 0
    %257 = vmatpush1.bf16.msra.mxu0 0
    %258 = vmatprep.subr.bf16.mxu0 0
    %259 = vmatpush1.bf16.msra.mxu0 0
    %260 = vmatprep.subr.bf16.mxu0 0
    %261 = vmatpush1.bf16.msra.mxu0 0
    %262 = vmatprep.subr.bf16.mxu0 0
    %263 = vmatpush1.bf16.msra.mxu0 0
    %264 = vmatprep.subr.bf16.mxu0 0
    %265 = vmatpush1.bf16.msra.mxu0 %v234
    %266 = vmatprep.subr.bf16.mxu0 0
    %267 = vmatpush1.bf16.msra.mxu0 %v233
    %268 = vmatprep.subr.bf16.mxu0 0
    %269 = vmatpush2.bf16.msra.mxu0 0
    %270 = vmatprep.subr.bf16.mxu0 0
    %271 = vmatpush2.bf16.msra.mxu0 0
    %272 = vmatprep.subr.bf16.mxu0 0
    %273 = vmatpush2.bf16.msra.mxu0 0
    %274 = vmatprep.subr.bf16.mxu0 0
    %275 = vmatpush2.bf16.msra.mxu0 0
    %276 = vmatprep.subr.bf16.mxu0 0
    %277 = vmatpush2.bf16.msra.mxu0 0
    %278 = vmatprep.subr.bf16.mxu0 0
    %279 = vmatpush2.bf16.msra.mxu0 0
    %280 = vmatprep.subr.bf16.mxu0 0
    %281 = vmatpush2.bf16.msra.mxu0 0
    %282 = vmatprep.subr.bf16.mxu0 0
    %283 = vmatpush2.bf16.msra.mxu0 0
    %284 = vmatprep.mubr.bf16.mxu0 0
    %285 = vmatmul.mubr.bf16.gmra.mxu0 %v247
    %v286 = vpop.f32.mrf.mxu0
    %v287 = vadd.f32 0.0, %v286
    %v288 = vpop.f32.mrf.mxu0
    %v289 = vpop.f32.mrf.mxu0
    %v290 = vadd.f32 0.0, %v289
    %v291 = vpop.f32.mrf.mxu0
    %292 = vmatprep.mubr.bf16.mxu0 0
    %293 = vmatmul.mubr.bf16.gmra.mxu0 %v250
    %v294 = vpop.f32.mrf.mxu0
    %v295 = vadd.f32 0.0, %v294
    %v296 = vpop.f32.mrf.mxu0
    %v297 = vpop.f32.mrf.mxu0
    %v298 = vadd.f32 0.0, %v297
    %v299 = vpop.f32.mrf.mxu0
    %300 = vdwg.mxu0
    %301 = vrot.lane.b32.xlu0 %v287, 32
    %v302 = vpop.permute.xlu0 %301
    %303 = vrot.lane.b32.xlu0 %v290, 32
    %v304 = vpop.permute.xlu0 %303
    %305 = vrot.lane.b32.xlu0 %v295, 32
    %v306 = vpop.permute.xlu0 %305
    %307 = vrot.lane.b32.xlu0 %v298, 32
    %v308 = vpop.permute.xlu0 %307
    %v309 = vadd.f32 %v225, %v302
    %v310 = vadd.f32 %v226, %v304
    %v311 = vadd.f32 %v227, %v306
    %v312 = vadd.f32 %v228, %v308
    %v313 = vpack.c.bf16 %v310, %v309
    %v314 = vpack.c.bf16 %v312, %v311
    %v315 = vld [vmem:[%s5] sm:$0x3]
    %v316 = vld [vmem:[#allocation10] sm:$0xf]
    %v317 = vld [vmem:[#allocation10 + $0x4] sm:$0xf]
    %v318 = vld [vmem:[#allocation10 + $0x8] sm:$0xf]
    %v319 = vld [vmem:[#allocation10 + $0xc] sm:$0xf]
    %v320 = vld [vmem:[#allocation10 + $0x10] sm:$0xf]
    %v321 = vld [vmem:[#allocation10 + $0x14] sm:$0xf]
    %v322 = vld [vmem:[#allocation10 + $0x18] sm:$0xf]
    %v323 = vld [vmem:[#allocation10 + $0x1c] sm:$0xf]
    %v324 = vld [vmem:[#allocation10 + $0x20] sm:$0xf]
    %v325 = vld [vmem:[#allocation10 + $0x24] sm:$0xf]
    %v326 = vld [vmem:[#allocation10 + $0x28] sm:$0xf]
    %v327 = vld [vmem:[#allocation10 + $0x2c] sm:$0xf]
    %v328 = vld [vmem:[#allocation10 + $0x30] sm:$0xf]
    %v329 = vld [vmem:[#allocation10 + $0x34] sm:$0xf]
    %v330 = vld [vmem:[#allocation10 + $0x38] sm:$0xf]
    %v331 = vld [vmem:[#allocation10 + $0x3c] sm:$0xf]
    %v332 = vlaneseq
    %v333 = vshrl.u32 %v332, 7
    %v334 = vsub.s32 0, %v333
    %v335 = vrot.slane %v315, %v334
    %v352 = vunpack.c.l.b16 %v316
    %v353 = vunpack.c.l.b16 %v317
    %v354 = vunpack.c.l.b16 %v318
    %v355 = vunpack.c.l.b16 %v319
    %v356 = vunpack.c.l.b16 %v320
    %v357 = vunpack.c.l.b16 %v321
    %v358 = vunpack.c.l.b16 %v322
    %v359 = vunpack.c.l.b16 %v323
    %v360 = vunpack.c.l.b16 %v324
    %v361 = vunpack.c.l.b16 %v325
    %v362 = vunpack.c.l.b16 %v326
    %v363 = vunpack.c.l.b16 %v327
    %v364 = vunpack.c.l.b16 %v328
    %v365 = vunpack.c.l.b16 %v329
    %v366 = vunpack.c.l.b16 %v330
    %v367 = vunpack.c.l.b16 %v331
    %v368 = vpack.c.b16 %v353, %v352
    %v369 = vpack.c.b16 %v355, %v354
    %v370 = vpack.c.b16 %v357, %v356
    %v371 = vpack.c.b16 %v359, %v358
    %v372 = vpack.c.b16 %v361, %v360
    %v373 = vpack.c.b16 %v363, %v362
    %v374 = vpack.c.b16 %v365, %v364
    %v375 = vpack.c.b16 %v367, %v366
    %384 = vmatprep.subr.bf16.mxu0 0
    %385 = vmatpush1.bf16.msra.mxu0 %v375
    %386 = vmatprep.subr.bf16.mxu0 0
    %387 = vmatpush1.bf16.msra.mxu0 %v374
    %388 = vmatprep.subr.bf16.mxu0 0
    %389 = vmatpush1.bf16.msra.mxu0 %v373
    %390 = vmatprep.subr.bf16.mxu0 0
    %391 = vmatpush1.bf16.msra.mxu0 %v372
    %392 = vmatprep.subr.bf16.mxu0 0
    %393 = vmatpush1.bf16.msra.mxu0 %v371
    %394 = vmatprep.subr.bf16.mxu0 0
    %395 = vmatpush1.bf16.msra.mxu0 %v370
    %396 = vmatprep.subr.bf16.mxu0 0
    %397 = vmatpush1.bf16.msra.mxu0 %v369
    %398 = vmatprep.subr.bf16.mxu0 0
    %399 = vmatpush1.bf16.msra.mxu0 %v368
    %400 = vmatprep.subr.bf16.mxu0 0
    %401 = vmatpush2.bf16.msra.mxu0 0
    %402 = vmatprep.subr.bf16.mxu0 0
    %403 = vmatpush2.bf16.msra.mxu0 0
    %404 = vmatprep.subr.bf16.mxu0 0
    %405 = vmatpush2.bf16.msra.mxu0 0
    %406 = vmatprep.subr.bf16.mxu0 0
    %407 = vmatpush2.bf16.msra.mxu0 0
    %408 = vmatprep.subr.bf16.mxu0 0
    %409 = vmatpush2.bf16.msra.mxu0 0
    %410 = vmatprep.subr.bf16.mxu0 0
    %411 = vmatpush2.bf16.msra.mxu0 0
    %412 = vmatprep.subr.bf16.mxu0 0
    %413 = vmatpush2.bf16.msra.mxu0 0
    %414 = vmatprep.subr.bf16.mxu0 0
    %415 = vmatpush2.bf16.msra.mxu0 0
    %416 = vmatprep.mubr.bf16.mxu0 0
    %417 = vmatmul.mubr.bf16.gmra.mxu0 %v313
    %v418 = vpop.f32.mrf.mxu0
    %v419 = vadd.f32 %v335, %v418
    %v420 = vpop.f32.mrf.mxu0
    %v421 = vpop.f32.mrf.mxu0
    %v422 = vadd.f32 %v335, %v421
    %v423 = vpop.f32.mrf.mxu0
    %424 = vmatprep.mubr.bf16.mxu0 0
    %425 = vmatmul.mubr.bf16.gmra.mxu0 %v314
    %v426 = vpop.f32.mrf.mxu0
    %v427 = vadd.f32 %v335, %v426
    %v428 = vpop.f32.mrf.mxu0
    %v429 = vpop.f32.mrf.mxu0
    %v430 = vadd.f32 %v335, %v429
    %v431 = vpop.f32.mrf.mxu0
    %432 = vdwg.mxu0
    %v433 = vmax.f32 %v419, 0.0
    %v434 = vmax.f32 %v422, 0.0
    %v435 = vmax.f32 %v427, 0.0
    %v436 = vmax.f32 %v430, 0.0
    %v437 = vld [vmem:[#allocation7] sm:$0xff]
    %v439 = vsel %vm245, %v437, 0
    %441 = vmatprep.subr.mxu0 0.0
    %442 = vmatpush1.msra.mxu0 0.0
    %443 = vmatprep.subr.mxu0 0.0
    %444 = vmatpush1.msra.mxu0 0.0
    %445 = vmatprep.subr.mxu0 0.0
    %446 = vmatpush1.msra.mxu0 0.0
    %447 = vmatprep.subr.mxu0 0.0
    %448 = vmatpush1.msra.mxu0 0.0
    %449 = vmatprep.subr.mxu0 0.0
    %450 = vmatpush1.msra.mxu0 0.0
    %451 = vmatprep.subr.mxu0 0.0
    %452 = vmatpush1.msra.mxu0 0.0
    %453 = vmatprep.subr.mxu0 0.0
    %454 = vmatpush1.msra.mxu0 0.0
    %455 = vmatprep.subr.mxu0 0.0
    %456 = vmatpush1.msra.mxu0 0.0
    %457 = vmatprep.subr.mxu0 0.0
    %458 = vmatpush1.msra.mxu0 0.0
    %459 = vmatprep.subr.mxu0 0.0
    %460 = vmatpush1.msra.mxu0 0.0
    %461 = vmatprep.subr.mxu0 0.0
    %462 = vmatpush1.msra.mxu0 0.0
    %463 = vmatprep.subr.mxu0 0.0
    %464 = vmatpush1.msra.mxu0 0.0
    %465 = vmatprep.subr.mxu0 0.0
    %466 = vmatpush1.msra.mxu0 %v436
    %467 = vmatprep.subr.mxu0 0.0
    %468 = vmatpush1.msra.mxu0 %v435
    %469 = vmatprep.subr.mxu0 0.0
    %470 = vmatpush1.msra.mxu0 %v434
    %471 = vmatprep.subr.mxu0 0.0
    %472 = vmatpush1.msra.mxu0 %v433
    %473 = vmatprep.subr.mxu0 0.0
    %474 = vmatpush2.msra.mxu0 0.0
    %475 = vmatprep.subr.mxu0 0.0
    %476 = vmatpush2.msra.mxu0 0.0
    %477 = vmatprep.subr.mxu0 0.0
    %478 = vmatpush2.msra.mxu0 0.0
    %479 = vmatprep.subr.mxu0 0.0
    %480 = vmatpush2.msra.mxu0 0.0
    %481 = vmatprep.subr.mxu0 0.0
    %482 = vmatpush2.msra.mxu0 0.0
    %483 = vmatprep.subr.mxu0 0.0
    %484 = vmatpush2.msra.mxu0 0.0
    %485 = vmatprep.subr.mxu0 0.0
    %486 = vmatpush2.msra.mxu0 0.0
    %487 = vmatprep.subr.mxu0 0.0
    %488 = vmatpush2.msra.mxu0 0.0
    %489 = vmatprep.subr.mxu0 0.0
    %490 = vmatpush2.msra.mxu0 0.0
    %491 = vmatprep.subr.mxu0 0.0
    %492 = vmatpush2.msra.mxu0 0.0
    %493 = vmatprep.subr.mxu0 0.0
    %494 = vmatpush2.msra.mxu0 0.0
    %495 = vmatprep.subr.mxu0 0.0
    %496 = vmatpush2.msra.mxu0 0.0
    %497 = vmatprep.subr.mxu0 0.0
    %498 = vmatpush2.msra.mxu0 0.0
    %499 = vmatprep.subr.mxu0 0.0
    %500 = vmatpush2.msra.mxu0 0.0
    %501 = vmatprep.subr.mxu0 0.0
    %502 = vmatpush2.msra.mxu0 0.0
    %503 = vmatprep.subr.mxu0 0.0
    %504 = vmatpush2.msra.mxu0 0.0
    %505 = vmatprep.mubr.f32.mxu0 0.0
    %506 = vmatmul.mubr.f32.gmra.mxu0 %v439
    %v507 = vpop.f32.mrf.mxu0
    %v508 = vadd.f32 0.0, %v507
    %v509 = vpop.f32.mrf.mxu0
    %510 = vdwg.mxu0
    %v511 = vlaneseq
    %v512 = vshrl.u32 %v511, 7
    %v513 = vsub.s32 1, %v512
    %v514 = vrot.slane %v315, %v513
    %v515 = vmul.f32 %v508, %v514
    %s516 = scalar_lea.vmem [#allocation3], 16
    %v517 = vld [vmem:[%s516] sm:$0xf]
    %v518 = vld [vmem:[%s516 + $0x4] sm:$0xf]
    %v519 = vld [vmem:[%s516 + $0x8] sm:$0xf]
    %v520 = vld [vmem:[%s516 + $0xc] sm:$0xf]
    %s521 = scalar_lea.vmem [#allocation8], 64
    %v522 = vld [vmem:[%s521] sm:$0xf]
    %v523 = vld [vmem:[%s521 + $0x4] sm:$0xf]
    %v524 = vld [vmem:[%s521 + $0x8] sm:$0xf]
    %v525 = vld [vmem:[%s521 + $0xc] sm:$0xf]
    %v526 = vld [vmem:[%s521 + $0x10] sm:$0xf]
    %v527 = vld [vmem:[%s521 + $0x14] sm:$0xf]
    %v528 = vld [vmem:[%s521 + $0x18] sm:$0xf]
    %v529 = vld [vmem:[%s521 + $0x1c] sm:$0xf]
    %v530 = vld [vmem:[%s521 + $0x20] sm:$0xf]
    %v531 = vld [vmem:[%s521 + $0x24] sm:$0xf]
    %v532 = vld [vmem:[%s521 + $0x28] sm:$0xf]
    %v533 = vld [vmem:[%s521 + $0x2c] sm:$0xf]
    %v534 = vld [vmem:[%s521 + $0x30] sm:$0xf]
    %v535 = vld [vmem:[%s521 + $0x34] sm:$0xf]
    %v536 = vld [vmem:[%s521 + $0x38] sm:$0xf]
    %v537 = vld [vmem:[%s521 + $0x3c] sm:$0xf]
    %v542 = vunpack.c.l.b16 %v517
    %v543 = vunpack.c.l.b16 %v518
    %v544 = vunpack.c.l.b16 %v519
    %v545 = vunpack.c.l.b16 %v520
    %v546 = vpack.c.b16 %v543, %v542
    %v547 = vpack.c.b16 %v545, %v544
    %v566 = vunpack.c.l.b16 %v522
    %v567 = vunpack.c.l.b16 %v523
    %v568 = vunpack.c.l.b16 %v524
    %v569 = vunpack.c.l.b16 %v525
    %v570 = vunpack.c.l.b16 %v526
    %v571 = vunpack.c.l.b16 %v527
    %v572 = vunpack.c.l.b16 %v528
    %v573 = vunpack.c.l.b16 %v529
    %v574 = vunpack.c.l.b16 %v530
    %v575 = vunpack.c.l.b16 %v531
    %v576 = vunpack.c.l.b16 %v532
    %v577 = vunpack.c.l.b16 %v533
    %v578 = vunpack.c.l.b16 %v534
    %v579 = vunpack.c.l.b16 %v535
    %v580 = vunpack.c.l.b16 %v536
    %v581 = vunpack.c.l.b16 %v537
    %v582 = vpack.c.b16 %v567, %v566
    %v583 = vpack.c.b16 %v569, %v568
    %v584 = vpack.c.b16 %v571, %v570
    %v585 = vpack.c.b16 %v573, %v572
    %v586 = vpack.c.b16 %v575, %v574
    %v587 = vpack.c.b16 %v577, %v576
    %v588 = vpack.c.b16 %v579, %v578
    %v589 = vpack.c.b16 %v581, %v580
    %598 = vmatprep.subr.bf16.mxu0 0
    %599 = vmatpush1.bf16.msra.mxu0 %v589
    %600 = vmatprep.subr.bf16.mxu0 0
    %601 = vmatpush1.bf16.msra.mxu0 %v588
    %602 = vmatprep.subr.bf16.mxu0 0
    %603 = vmatpush1.bf16.msra.mxu0 %v587
    %604 = vmatprep.subr.bf16.mxu0 0
    %605 = vmatpush1.bf16.msra.mxu0 %v586
    %606 = vmatprep.subr.bf16.mxu0 0
    %607 = vmatpush1.bf16.msra.mxu0 %v585
    %608 = vmatprep.subr.bf16.mxu0 0
    %609 = vmatpush1.bf16.msra.mxu0 %v584
    %610 = vmatprep.subr.bf16.mxu0 0
    %611 = vmatpush1.bf16.msra.mxu0 %v583
    %612 = vmatprep.subr.bf16.mxu0 0
    %613 = vmatpush1.bf16.msra.mxu0 %v582
    %614 = vmatprep.subr.bf16.mxu0 0
    %615 = vmatpush2.bf16.msra.mxu0 0
    %616 = vmatprep.subr.bf16.mxu0 0
    %617 = vmatpush2.bf16.msra.mxu0 0
    %618 = vmatprep.subr.bf16.mxu0 0
    %619 = vmatpush2.bf16.msra.mxu0 0
    %620 = vmatprep.subr.bf16.mxu0 0
    %621 = vmatpush2.bf16.msra.mxu0 0
    %622 = vmatprep.subr.bf16.mxu0 0
    %623 = vmatpush2.bf16.msra.mxu0 0
    %624 = vmatprep.subr.bf16.mxu0 0
    %625 = vmatpush2.bf16.msra.mxu0 0
    %626 = vmatprep.subr.bf16.mxu0 0
    %627 = vmatpush2.bf16.msra.mxu0 0
    %628 = vmatprep.subr.bf16.mxu0 0
    %629 = vmatpush2.bf16.msra.mxu0 0
    %630 = vmatprep.mubr.bf16.mxu0 0
    %631 = vmatmul.mubr.bf16.gmra.mxu0 %v546
    %v632 = vpop.f32.mrf.mxu0
    %v633 = vadd.f32 0.0, %v632
    %v634 = vpop.f32.mrf.mxu0
    %v635 = vpop.f32.mrf.mxu0
    %v636 = vadd.f32 0.0, %v635
    %v637 = vpop.f32.mrf.mxu0
    %638 = vmatprep.mubr.bf16.mxu0 0
    %639 = vmatmul.mubr.bf16.gmra.mxu0 %v547
    %v640 = vpop.f32.mrf.mxu0
    %v641 = vadd.f32 0.0, %v640
    %v642 = vpop.f32.mrf.mxu0
    %v643 = vpop.f32.mrf.mxu0
    %v644 = vadd.f32 0.0, %v643
    %v645 = vpop.f32.mrf.mxu0
    %646 = vdwg.mxu0
    %v647 = vmax.f32 %v633, 0.0
    %v648 = vmax.f32 %v636, 0.0
    %v649 = vmax.f32 %v641, 0.0
    %v650 = vmax.f32 %v644, 0.0
    %s651 = scalar_lea.vmem [#allocation5], 16
    %v652 = vld [vmem:[%s651] sm:$0xf]
    %v653 = vld [vmem:[%s651 + $0x4] sm:$0xf]
    %v654 = vld [vmem:[%s651 + $0x8] sm:$0xf]
    %v655 = vld [vmem:[%s651 + $0xc] sm:$0xf]
    %v656 = vpack.c.bf16 %v648, %v647
    %v657 = vpack.c.bf16 %v650, %v649
    %v662 = vunpack.c.l.b16 %v652
    %v663 = vunpack.c.l.b16 %v653
    %v664 = vunpack.c.l.b16 %v654
    %v665 = vunpack.c.l.b16 %v655
    %v666 = vpack.c.b16 %v663, %v662
    %v667 = vpack.c.b16 %v665, %v664
    %v669 = vsel %vm245, %v666, 0
    %v672 = vsel %vm245, %v667, 0
    %674 = vmatprep.subr.bf16.mxu0 0
    %675 = vmatpush1.bf16.msra.mxu0 0
    %676 = vmatprep.subr.bf16.mxu0 0
    %677 = vmatpush1.bf16.msra.mxu0 0
    %678 = vmatprep.subr.bf16.mxu0 0
    %679 = vmatpush1.bf16.msra.mxu0 0
    %680 = vmatprep.subr.bf16.mxu0 0
    %681 = vmatpush1.bf16.msra.mxu0 0
    %682 = vmatprep.subr.bf16.mxu0 0
    %683 = vmatpush1.bf16.msra.mxu0 0
    %684 = vmatprep.subr.bf16.mxu0 0
    %685 = vmatpush1.bf16.msra.mxu0 0
    %686 = vmatprep.subr.bf16.mxu0 0
    %687 = vmatpush1.bf16.msra.mxu0 %v657
    %688 = vmatprep.subr.bf16.mxu0 0
    %689 = vmatpush1.bf16.msra.mxu0 %v656
    %690 = vmatprep.subr.bf16.mxu0 0
    %691 = vmatpush2.bf16.msra.mxu0 0
    %692 = vmatprep.subr.bf16.mxu0 0
    %693 = vmatpush2.bf16.msra.mxu0 0
    %694 = vmatprep.subr.bf16.mxu0 0
    %695 = vmatpush2.bf16.msra.mxu0 0
    %696 = vmatprep.subr.bf16.mxu0 0
    %697 = vmatpush2.bf16.msra.mxu0 0
    %698 = vmatprep.subr.bf16.mxu0 0
    %699 = vmatpush2.bf16.msra.mxu0 0
    %700 = vmatprep.subr.bf16.mxu0 0
    %701 = vmatpush2.bf16.msra.mxu0 0
    %702 = vmatprep.subr.bf16.mxu0 0
    %703 = vmatpush2.bf16.msra.mxu0 0
    %704 = vmatprep.subr.bf16.mxu0 0
    %705 = vmatpush2.bf16.msra.mxu0 0
    %706 = vmatprep.mubr.bf16.mxu0 0
    %707 = vmatmul.mubr.bf16.gmra.mxu0 %v669
    %v708 = vpop.f32.mrf.mxu0
    %v709 = vadd.f32 0.0, %v708
    %v710 = vpop.f32.mrf.mxu0
    %v711 = vpop.f32.mrf.mxu0
    %v712 = vadd.f32 0.0, %v711
    %v713 = vpop.f32.mrf.mxu0
    %714 = vmatprep.mubr.bf16.mxu0 0
    %715 = vmatmul.mubr.bf16.gmra.mxu0 %v672
    %v716 = vpop.f32.mrf.mxu0
    %v717 = vadd.f32 0.0, %v716
    %v718 = vpop.f32.mrf.mxu0
    %v719 = vpop.f32.mrf.mxu0
    %v720 = vadd.f32 0.0, %v719
    %v721 = vpop.f32.mrf.mxu0
    %722 = vdwg.mxu0
    %723 = vrot.lane.b32.xlu0 %v709, 32
    %v724 = vpop.permute.xlu0 %723
    %725 = vrot.lane.b32.xlu0 %v712, 32
    %v726 = vpop.permute.xlu0 %725
    %727 = vrot.lane.b32.xlu0 %v717, 32
    %v728 = vpop.permute.xlu0 %727
    %729 = vrot.lane.b32.xlu0 %v720, 32
    %v730 = vpop.permute.xlu0 %729
    %v731 = vadd.f32 %v647, %v724
    %v732 = vadd.f32 %v648, %v726
    %v733 = vadd.f32 %v649, %v728
    %v734 = vadd.f32 %v650, %v730
    %v735 = vpack.c.bf16 %v732, %v731
    %v736 = vpack.c.bf16 %v734, %v733
    %s737 = scalar_lea.vmem %s5, 2
    %v738 = vld [vmem:[%s737] sm:$0x3]
    %s739 = scalar_lea.vmem [#allocation10], 64
    %v740 = vld [vmem:[%s739] sm:$0xf]
    %v741 = vld [vmem:[%s739 + $0x4] sm:$0xf]
    %v742 = vld [vmem:[%s739 + $0x8] sm:$0xf]
    %v743 = vld [vmem:[%s739 + $0xc] sm:$0xf]
    %v744 = vld [vmem:[%s739 + $0x10] sm:$0xf]
    %v745 = vld [vmem:[%s739 + $0x14] sm:$0xf]
    %v746 = vld [vmem:[%s739 + $0x18] sm:$0xf]
    %v747 = vld [vmem:[%s739 + $0x1c] sm:$0xf]
    %v748 = vld [vmem:[%s739 + $0x20] sm:$0xf]
    %v749 = vld [vmem:[%s739 + $0x24] sm:$0xf]
    %v750 = vld [vmem:[%s739 + $0x28] sm:$0xf]
    %v751 = vld [vmem:[%s739 + $0x2c] sm:$0xf]
    %v752 = vld [vmem:[%s739 + $0x30] sm:$0xf]
    %v753 = vld [vmem:[%s739 + $0x34] sm:$0xf]
    %v754 = vld [vmem:[%s739 + $0x38] sm:$0xf]
    %v755 = vld [vmem:[%s739 + $0x3c] sm:$0xf]
    %v756 = vlaneseq
    %v757 = vshrl.u32 %v756, 7
    %v758 = vsub.s32 0, %v757
    %v759 = vrot.slane %v738, %v758
    %v776 = vunpack.c.l.b16 %v740
    %v777 = vunpack.c.l.b16 %v741
    %v778 = vunpack.c.l.b16 %v742
    %v779 = vunpack.c.l.b16 %v743
    %v780 = vunpack.c.l.b16 %v744
    %v781 = vunpack.c.l.b16 %v745
    %v782 = vunpack.c.l.b16 %v746
    %v783 = vunpack.c.l.b16 %v747
    %v784 = vunpack.c.l.b16 %v748
    %v785 = vunpack.c.l.b16 %v749
    %v786 = vunpack.c.l.b16 %v750
    %v787 = vunpack.c.l.b16 %v751
    %v788 = vunpack.c.l.b16 %v752
    %v789 = vunpack.c.l.b16 %v753
    %v790 = vunpack.c.l.b16 %v754
    %v791 = vunpack.c.l.b16 %v755
    %v792 = vpack.c.b16 %v777, %v776
    %v793 = vpack.c.b16 %v779, %v778
    %v794 = vpack.c.b16 %v781, %v780
    %v795 = vpack.c.b16 %v783, %v782
    %v796 = vpack.c.b16 %v785, %v784
    %v797 = vpack.c.b16 %v787, %v786
    %v798 = vpack.c.b16 %v789, %v788
    %v799 = vpack.c.b16 %v791, %v790
    %808 = vmatprep.subr.bf16.mxu0 0
    %809 = vmatpush1.bf16.msra.mxu0 %v799
    %810 = vmatprep.subr.bf16.mxu0 0
    %811 = vmatpush1.bf16.msra.mxu0 %v798
    %812 = vmatprep.subr.bf16.mxu0 0
    %813 = vmatpush1.bf16.msra.mxu0 %v797
    %814 = vmatprep.subr.bf16.mxu0 0
    %815 = vmatpush1.bf16.msra.mxu0 %v796
    %816 = vmatprep.subr.bf16.mxu0 0
    %817 = vmatpush1.bf16.msra.mxu0 %v795
    %818 = vmatprep.subr.bf16.mxu0 0
    %819 = vmatpush1.bf16.msra.mxu0 %v794
    %820 = vmatprep.subr.bf16.mxu0 0
    %821 = vmatpush1.bf16.msra.mxu0 %v793
    %822 = vmatprep.subr.bf16.mxu0 0
    %823 = vmatpush1.bf16.msra.mxu0 %v792
    %824 = vmatprep.subr.bf16.mxu0 0
    %825 = vmatpush2.bf16.msra.mxu0 0
    %826 = vmatprep.subr.bf16.mxu0 0
    %827 = vmatpush2.bf16.msra.mxu0 0
    %828 = vmatprep.subr.bf16.mxu0 0
    %829 = vmatpush2.bf16.msra.mxu0 0
    %830 = vmatprep.subr.bf16.mxu0 0
    %831 = vmatpush2.bf16.msra.mxu0 0
    %832 = vmatprep.subr.bf16.mxu0 0
    %833 = vmatpush2.bf16.msra.mxu0 0
    %834 = vmatprep.subr.bf16.mxu0 0
    %835 = vmatpush2.bf16.msra.mxu0 0
    %836 = vmatprep.subr.bf16.mxu0 0
    %837 = vmatpush2.bf16.msra.mxu0 0
    %838 = vmatprep.subr.bf16.mxu0 0
    %839 = vmatpush2.bf16.msra.mxu0 0
    %840 = vmatprep.mubr.bf16.mxu0 0
    %841 = vmatmul.mubr.bf16.gmra.mxu0 %v735
    %v842 = vpop.f32.mrf.mxu0
    %v843 = vadd.f32 %v759, %v842
    %v844 = vpop.f32.mrf.mxu0
    %v845 = vpop.f32.mrf.mxu0
    %v846 = vadd.f32 %v759, %v845
    %v847 = vpop.f32.mrf.mxu0
    %848 = vmatprep.mubr.bf16.mxu0 0
    %849 = vmatmul.mubr.bf16.gmra.mxu0 %v736
    %v850 = vpop.f32.mrf.mxu0
    %v851 = vadd.f32 %v759, %v850
    %v852 = vpop.f32.mrf.mxu0
    %v853 = vpop.f32.mrf.mxu0
    %v854 = vadd.f32 %v759, %v853
    %v855 = vpop.f32.mrf.mxu0
    %856 = vdwg.mxu0
    %v857 = vmax.f32 %v843, 0.0
    %v858 = vmax.f32 %v846, 0.0
    %v859 = vmax.f32 %v851, 0.0
    %v860 = vmax.f32 %v854, 0.0
    %s861 = scalar_lea.vmem [#allocation7], 8
    %v862 = vld [vmem:[%s861] sm:$0xff]
    %v864 = vsel %vm245, %v862, 0
    %866 = vmatprep.subr.mxu0 0.0
    %867 = vmatpush1.msra.mxu0 0.0
    %868 = vmatprep.subr.mxu0 0.0
    %869 = vmatpush1.msra.mxu0 0.0
    %870 = vmatprep.subr.mxu0 0.0
    %871 = vmatpush1.msra.mxu0 0.0
    %872 = vmatprep.subr.mxu0 0.0
    %873 = vmatpush1.msra.mxu0 0.0
    %874 = vmatprep.subr.mxu0 0.0
    %875 = vmatpush1.msra.mxu0 0.0
    %876 = vmatprep.subr.mxu0 0.0
    %877 = vmatpush1.msra.mxu0 0.0
    %878 = vmatprep.subr.mxu0 0.0
    %879 = vmatpush1.msra.mxu0 0.0
    %880 = vmatprep.subr.mxu0 0.0
    %881 = vmatpush1.msra.mxu0 0.0
    %882 = vmatprep.subr.mxu0 0.0
    %883 = vmatpush1.msra.mxu0 0.0
    %884 = vmatprep.subr.mxu0 0.0
    %885 = vmatpush1.msra.mxu0 0.0
    %886 = vmatprep.subr.mxu0 0.0
    %887 = vmatpush1.msra.mxu0 0.0
    %888 = vmatprep.subr.mxu0 0.0
    %889 = vmatpush1.msra.mxu0 0.0
    %890 = vmatprep.subr.mxu0 0.0
    %891 = vmatpush1.msra.mxu0 %v860
    %892 = vmatprep.subr.mxu0 0.0
    %893 = vmatpush1.msra.mxu0 %v859
    %894 = vmatprep.subr.mxu0 0.0
    %895 = vmatpush1.msra.mxu0 %v858
    %896 = vmatprep.subr.mxu0 0.0
    %897 = vmatpush1.msra.mxu0 %v857
    %898 = vmatprep.subr.mxu0 0.0
    %899 = vmatpush2.msra.mxu0 0.0
    %900 = vmatprep.subr.mxu0 0.0
    %901 = vmatpush2.msra.mxu0 0.0
    %902 = vmatprep.subr.mxu0 0.0
    %903 = vmatpush2.msra.mxu0 0.0
    %904 = vmatprep.subr.mxu0 0.0
    %905 = vmatpush2.msra.mxu0 0.0
    %906 = vmatprep.subr.mxu0 0.0
    %907 = vmatpush2.msra.mxu0 0.0
    %908 = vmatprep.subr.mxu0 0.0
    %909 = vmatpush2.msra.mxu0 0.0
    %910 = vmatprep.subr.mxu0 0.0
    %911 = vmatpush2.msra.mxu0 0.0
    %912 = vmatprep.subr.mxu0 0.0
    %913 = vmatpush2.msra.mxu0 0.0
    %914 = vmatprep.subr.mxu0 0.0
    %915 = vmatpush2.msra.mxu0 0.0
    %916 = vmatprep.subr.mxu0 0.0
    %917 = vmatpush2.msra.mxu0 0.0
    %918 = vmatprep.subr.mxu0 0.0
    %919 = vmatpush2.msra.mxu0 0.0
    %920 = vmatprep.subr.mxu0 0.0
    %921 = vmatpush2.msra.mxu0 0.0
    %922 = vmatprep.subr.mxu0 0.0
    %923 = vmatpush2.msra.mxu0 0.0
    %924 = vmatprep.subr.mxu0 0.0
    %925 = vmatpush2.msra.mxu0 0.0
    %926 = vmatprep.subr.mxu0 0.0
    %927 = vmatpush2.msra.mxu0 0.0
    %928 = vmatprep.subr.mxu0 0.0
    %929 = vmatpush2.msra.mxu0 0.0
    %930 = vmatprep.mubr.f32.mxu0 0.0
    %931 = vmatmul.mubr.f32.gmra.mxu0 %v864
    %v932 = vpop.f32.mrf.mxu0
    %v933 = vadd.f32 0.0, %v932
    %v934 = vpop.f32.mrf.mxu0
    %935 = vdwg.mxu0
    %v936 = vlaneseq
    %v937 = vshrl.u32 %v936, 7
    %v938 = vsub.s32 1, %v937
    %v939 = vrot.slane %v738, %v938
    %v940 = vmul.f32 %v933, %v939
    %v941 = vadd.f32 %v515, %v940
    %942 = vadd.xlane.f32.xlu0 %v941
    %v943 = vpop.xlane.xlu0 %942
    %s944 = sld [smem:[#allocation2]]
    %v945 = vstv %s944
    %v946 = vadd.f32 %v943, %v945
    %947 = vst [vmem:[%s7] sm:$0xff] %v946
    // Predicated region
    $region50: #{net_forward.1} parent=1 // pred_check
      _
    $region51: #{net_forward.1} parent=1 // pred_check_branch
      %949 = sbr.rel (0) target = $region53
    $region52: #{net_forward.1} parent=1 // pred_region
      _
    $region53: #{net_forward.1} parent=1 // pred_fallthru
      _
    // Predicated region
    $region54: #{net_forward.1} parent=1 // pred_check
      _
    $region55: #{net_forward.1} parent=1 // pred_check_branch
      %951 = sbr.rel (0) target = $region57
    $region56: #{net_forward.1} parent=1 // pred_region
      _
    $region57: #{net_forward.1} parent=1 // pred_fallthru
      _
    %952 = vsyncpa [#allocation4], 1
    %953 = vsyncpa [#allocation6], 1
    %954 = vsyncpa [#allocation9], 1

</llo_original>
